<compile_context>
chip_gen: v7x
topology: tpu7x:2x2x1
jax: 0.10.0
libtpu: 0.0.40
codegen_flags: <defaults>
</compile_context>

<pallas_src>
from functools import partial

import jax
import jax.numpy as jnp
from jax.experimental import pallas as pl
from jax.experimental.pallas import tpu as pltpu


def _round_up(x, m):
    return (x + m - 1) // m * m


def _tpu_memory_model():
    """Return (vmem_capacity_bytes, num_tensorcores) for the local chip.

    v5e/v6e: 128 MiB VMEM, 1 TensorCore.  v7x: 64 MiB per TC, 2 TCs.
    Falls back to conservative values if the query is unavailable.
    """
    try:
        vmem = int(pltpu.get_tpu_info().vmem_capacity_bytes)
    except Exception:
        return 64 * 1024 * 1024, 1
    cores = 2 if vmem < 100 * 1024 * 1024 else 1
    return vmem, cores


def _images_per_step(batch, npad, kp, emp, nt, in_bytes, out_bytes,
                     vmem_limit, num_cores):
    """Images per grid step: biggest M tile that fits VMEM and the row target."""
    # Per-image VMEM: double-buffered patch block + output block, plus the
    # in-kernel f32 accumulator / epilogue intermediate (counted twice to be
    # conservative about compiler temporaries).
    per_img = (2 * npad * kp * in_bytes
               + 2 * nt * emp * out_bytes
               + 2 * npad * emp * 4)
    # Resident blocks: weight and fused-pos table (2 buffers each by default).
    fixed = 2 * kp * emp * in_bytes + 2 * npad * emp * 4
    budget = int(vmem_limit * 0.8) - fixed
    tb_vmem = max(1, budget // max(per_img, 1))
    # Single-TC chips (v5e/v6e): feed the MXU / DMA with ~2048-row tiles.
    # v7x (2 TC, 64 MiB): ~512-1024-row tiles so both cores stay busy.
    target_rows = 2048 if num_cores == 1 else 768
    tb = max(1, min(batch, tb_vmem, max(1, target_rows // npad)))
    # On multi-TC chips keep >= 2 grid steps per TensorCore when the batch is
    # large enough to split, for megacore load balance.
    if num_cores > 1 and batch >= 2 * num_cores:
        tb = min(tb, max(1, -(-batch // (2 * num_cores))))
    return tb


def _embed_kernel(p_ref, w_ref, pos_ref, o_ref):
    # p_ref:   (TB, Np, Kp)   zero-prefixed patches of TB images (compute dtype)
    # w_ref:   (Kp, Emp)      conv weight, flattened & transposed (compute dtype)
    # pos_ref: (Np, Emp) f32  row 0 = cls + pos[0]; rows 1..N = pos[1:] + bias
    # o_ref:   (TB, Nt, Emp)  output tokens, Nt = N + 1 (compute dtype)
    tb, npad, kp = p_ref.shape
    nt = o_ref.shape[1]
    # Np % 8 == 0 and Kp % 128 == 0, so merging the leading dims is a
    # layout-friendly reshape.
    p2 = p_ref[...].reshape(tb * npad, kp)
    acc = jnp.dot(p2, w_ref[...], preferred_element_type=jnp.float32)
    acc = acc.reshape(tb, npad, -1) + pos_ref[...]          # f32 epilogue
    # Store the sublane-aligned bulk unmasked; only the final partial sublane
    # group (Nt % 8 rows) uses a masked store.  Avoids copying/slicing the whole
    # accumulator on an unaligned boundary.
    nt_al = (nt // 8) * 8
    if nt_al > 0:
        o_ref[:, :nt_al, :] = acc[:, :nt_al, :].astype(o_ref.dtype)
    if nt_al < nt:
        o_ref[:, nt_al:, :] = acc[:, nt_al:nt, :].astype(o_ref.dtype)


def patch_embed_pallas(patches_padded, w_t, pos_fused, n_tokens):
    """patches_padded: (B, Np, Kp); w_t: (Kp, Emp); pos_fused: (Np, Emp) f32.
    Returns (B, n_tokens, Emp) in patches_padded.dtype, cls row fused in."""
    B, Np, Kp = patches_padded.shape
    Emp = w_t.shape[1]
    out_dtype = patches_padded.dtype
    itemsize = jnp.dtype(out_dtype).itemsize

    vmem_cap, num_cores = _tpu_memory_model()
    vmem_limit = (vmem_cap * 3) // 4          # 96 MiB on v5e/v6e, 48 MiB on v7x
    TB = _images_per_step(B, Np, Kp, Emp, n_tokens, itemsize, itemsize,
                          vmem_limit, num_cores)
    grid = (pl.cdiv(B, TB),)

    return pl.pallas_call(
        _embed_kernel,
        out_shape=jax.ShapeDtypeStruct((B, n_tokens, Emp), out_dtype),
        grid_spec=pltpu.PrefetchScalarGridSpec(
            num_scalar_prefetch=0,
            grid=grid,
            in_specs=[
                pl.BlockSpec((TB, Np, Kp), lambda i: (i, 0, 0)),
                pl.BlockSpec((Kp, Emp), lambda i: (0, 0)),
                pl.BlockSpec((Np, Emp), lambda i: (0, 0)),
            ],
            out_specs=pl.BlockSpec((TB, n_tokens, Emp), lambda i: (i, 0, 0)),
        ),
        compiler_params=pltpu.CompilerParams(
            dimension_semantics=("parallel",),
            vmem_limit_bytes=int(vmem_limit),
        ),
    )(patches_padded, w_t, pos_fused)


@partial(jax.jit, static_argnames=("patch_size", "compute_dtype"))
def embedding_forward(x, conv_w, conv_b, cls, pos, patch_size,
                      compute_dtype=jnp.bfloat16):
    """x: (B, C, H, W) NCHW (PyTorch convention). Returns (B, N+1, Em) in
    compute_dtype (accumulation stays f32 inside the kernel)."""
    B, C, H, W = x.shape
    ph, pw = patch_size
    nH, nW = H // ph, W // pw
    N = nH * nW
    Em = conv_w.shape[0]
    K = C * ph * pw
    Nt = N + 1
    Np = _round_up(Nt, 8)      # sublane-aligned token axis inside the kernel
    Kp = _round_up(K, 128)     # lane-aligned contraction dim (unmasked loads)
    Emp = _round_up(Em, 128)   # lane-dense output stores

    # im2col: flatten each non-overlapping patch in (C, kh, kw) order to match
    # the PyTorch Conv2d weight layout (Em, C, kh, kw).
    # TODO(synk): move this patch extraction into the kernel to drop the extra
    # HBM round trip of the flattened patch tensor.
    patches = x.reshape(B, C, nH, ph, nW, pw)
    patches = patches.transpose(0, 2, 4, 1, 3, 5).reshape(B, N, K)
    # Row 0 is zero so the matmul contributes nothing to the cls token; rows
    # beyond N+1 are sublane padding that never reach the output; K padding is
    # zero so it contributes nothing to the contraction.
    patches = jnp.pad(patches, ((0, 0), (1, Np - 1 - N), (0, Kp - K)))
    patches = patches.astype(compute_dtype)

    w_t = conv_w.reshape(Em, K).T                                     # (K, Em)
    w_t = jnp.pad(w_t, ((0, Kp - K), (0, Emp - Em))).astype(compute_dtype)

    # Fused positional table: row 0 carries cls + pos[0]; rows 1..N carry
    # pos[1:] + conv bias (bias folded in).  Kept in f32 for the epilogue.
    pos_fused = jnp.concatenate(
        [cls.reshape(1, Em) + pos[0:1], pos[1:] + conv_b[None, :]], axis=0)
    pos_fused = jnp.pad(pos_fused, ((0, Np - Nt), (0, Emp - Em)))
    pos_fused = pos_fused.astype(jnp.float32)

    out = patch_embed_pallas(patches, w_t, pos_fused, Nt)   # (B, Nt, Emp)
    return out if Emp == Em else out[..., :Em]


def embedding_reference(x, conv_w, conv_b, cls, pos, patch_size):
    """Pure-JAX reference mirroring the PyTorch forward."""
    B, C, H, W = x.shape
    ph, pw = patch_size
    nH, nW = H // ph, W // pw
    Em = conv_w.shape[0]
    y = jax.lax.conv_general_dilated(
        x, conv_w, window_strides=(ph, pw), padding="VALID",
        dimension_numbers=("NCHW", "OIHW", "NCHW"))
    y = y + conv_b.reshape(1, Em, 1, 1)
    y = y.reshape(B, Em, nH * nW).transpose(0, 2, 1)       # B (H W) Em
    cls_tok = jnp.broadcast_to(cls.reshape(1, 1, Em), (B, 1, Em))
    y = jnp.concatenate([cls_tok, y], axis=1)
    return y + pos


if __name__ == "__main__":
    # Small shapes consistent with the module's forward:
    B, C, H, W = 2, 4, 16, 16
    patch_size = (4, 4)
    Em = 32
    nH, nW = H // patch_size[0], W // patch_size[1]
    N = nH * nW

    key = jax.random.PRNGKey(0)
    kx, kw, kb, kc, kp = jax.random.split(key, 5)
    x = jax.random.normal(kx, (B, C, H, W), dtype=jnp.float32)
    conv_w = jax.random.normal(kw, (Em, C, patch_size[0], patch_size[1]),
                               dtype=jnp.float32) * 0.05
    conv_b = jax.random.normal(kb, (Em,), dtype=jnp.float32) * 0.05
    cls = jax.random.normal(kc, (1, 1, Em), dtype=jnp.float32)
    pos = jax.random.normal(kp, (N + 1, Em), dtype=jnp.float32)

    ref = embedding_reference(x, conv_w, conv_b, cls, pos, patch_size)

    # Fast path: bf16 operands AND bf16 output, f32 accumulation in-kernel.
    out_bf16 = embedding_forward(x, conv_w, conv_b, cls, pos,
                                 patch_size=patch_size,
                                 compute_dtype=jnp.bfloat16)
    out_bf16 = jax.block_until_ready(out_bf16)
    assert out_bf16.shape == (B, N + 1, Em), out_bf16.shape
    assert out_bf16.dtype == jnp.bfloat16, out_bf16.dtype
    assert jnp.allclose(out_bf16.astype(jnp.float32), ref, atol=3e-2, rtol=3e-2), \
        float(jnp.max(jnp.abs(out_bf16.astype(jnp.float32) - ref)))

    # Full-f32 path for a tight numerical check of the kernel structure.
    out_f32 = embedding_forward(x, conv_w, conv_b, cls, pos,
                                patch_size=patch_size,
                                compute_dtype=jnp.float32)
    out_f32 = jax.block_until_ready(out_f32)
    assert out_f32.shape == (B, N + 1, Em), out_f32.shape
    assert jnp.allclose(out_f32, ref, atol=1e-4, rtol=1e-4), \
        float(jnp.max(jnp.abs(out_f32 - ref)))

    # Awkward (odd) batch size to exercise the cdiv-based grid path.
    B2 = 3
    x2 = jax.random.normal(jax.random.PRNGKey(1), (B2, C, H, W), dtype=jnp.float32)
    ref2 = embedding_reference(x2, conv_w, conv_b, cls, pos, patch_size)
    out2 = embedding_forward(x2, conv_w, conv_b, cls, pos,
                             patch_size=patch_size,
                             compute_dtype=jnp.float32)
    out2 = jax.block_until_ready(out2)
    assert out2.shape == (B2, N + 1, Em), out2.shape
    assert jnp.allclose(out2, ref2, atol=1e-4, rtol=1e-4), \
        float(jnp.max(jnp.abs(out2 - ref2)))

    print("KERNEL_OK")
</pallas_src>

<mosaic_0001>
module attributes {stable_mosaic.version = 11 : i64} {
  func.func @_embed_kernel(%arg0: i32, %arg1: memref<2x24x128xbf16, #tpu.memory_space<vmem>>, %arg2: memref<128x128xbf16, #tpu.memory_space<vmem>>, %arg3: memref<24x128xf32, #tpu.memory_space<vmem>>, %arg4: memref<2x17x128xbf16, #tpu.memory_space<vmem>>) attributes {dimension_semantics = [#tpu.dimension_semantics<parallel>], iteration_bounds = array<i64: 1>, scalar_prefetch = 0 : i64, scratch_operands = 0 : i64, tpu.core_type = #tpu.core_type<tc>, window_params = [{transform_indices = @transform_0, window_bounds = array<i64: 2, 24, 128>}, {pipeline_mode = #tpu.pipeline_mode<synchronous>, transform_indices = @transform_1, window_bounds = array<i64: 128, 128>}, {pipeline_mode = #tpu.pipeline_mode<synchronous>, transform_indices = @transform_2, window_bounds = array<i64: 24, 128>}, {transform_indices = @transform_3, window_bounds = array<i64: 2, 17, 128>}]} {
    %c0 = arith.constant 0 : index
    %c0_0 = arith.constant 0 : index
    %c0_1 = arith.constant 0 : index
    %0 = vector.load %arg1[%c0, %c0_0, %c0_1] : memref<2x24x128xbf16, #tpu.memory_space<vmem>>, vector<2x24x128xbf16>
    %1 = vector.shape_cast %0 : vector<2x24x128xbf16> to vector<48x128xbf16>
    %c0_2 = arith.constant 0 : index
    %c0_3 = arith.constant 0 : index
    %2 = vector.load %arg2[%c0_2, %c0_3] : memref<128x128xbf16, #tpu.memory_space<vmem>>, vector<128x128xbf16>
    %cst = arith.constant dense<0.000000e+00> : vector<48x128xf32>
    %3 = tpu.matmul %1, %2, %cst {dimension_numbers = #tpu.dot_dimension_numbers<[1], [0], [0], [1], [0, 0, 1, 1], [], []>} : vector<48x128xbf16>, vector<128x128xbf16>, vector<48x128xf32> -> vector<48x128xf32>
    %4 = vector.shape_cast %3 : vector<48x128xf32> to vector<2x24x128xf32>
    %c0_4 = arith.constant 0 : index
    %c0_5 = arith.constant 0 : index
    %5 = vector.load %arg3[%c0_4, %c0_5] : memref<24x128xf32, #tpu.memory_space<vmem>>, vector<24x128xf32>
    %6 = vector.shape_cast %5 : vector<24x128xf32> to vector<1x24x128xf32>
    %7 = vector.broadcast %6 : vector<1x24x128xf32> to vector<2x24x128xf32>
    %8 = arith.addf %4, %7 : vector<2x24x128xf32>
    %9 = vector.extract_strided_slice %8 {offsets = [0, 0, 0], sizes = [2, 16, 128], strides = [1, 1, 1]} : vector<2x24x128xf32> to vector<2x16x128xf32>
    %10 = arith.truncf %9 : vector<2x16x128xf32> to vector<2x16x128xbf16>
    %c0_6 = arith.constant 0 : index
    %c0_7 = arith.constant 0 : index
    %c0_8 = arith.constant 0 : index
    %11 = vector.load %arg4[%c0_6, %c0_7, %c0_8] : memref<2x17x128xbf16, #tpu.memory_space<vmem>>, vector<2x16x128xbf16>
    tpu.vector_store %arg4[%c0_6, %c0_7, %c0_8], %10 {strides = array<i32>} : memref<2x17x128xbf16, #tpu.memory_space<vmem>>, vector<2x16x128xbf16>,
    %12 = vector.extract_strided_slice %8 {offsets = [0, 16, 0], sizes = [2, 1, 128], strides = [1, 1, 1]} : vector<2x24x128xf32> to vector<2x1x128xf32>
    %13 = arith.truncf %12 : vector<2x1x128xf32> to vector<2x1x128xbf16>
    %c0_9 = arith.constant 0 : index
    %c16 = arith.constant 16 : index
    %c0_10 = arith.constant 0 : index
    %14 = vector.load %arg4[%c0_9, %c16, %c0_10] : memref<2x17x128xbf16, #tpu.memory_space<vmem>>, vector<2x1x128xbf16>
    tpu.vector_store %arg4[%c0_9, %c16, %c0_10], %13 {strides = array<i32>} : memref<2x17x128xbf16, #tpu.memory_space<vmem>>, vector<2x1x128xbf16>,
    return
  }
  func.func @transform_0(%arg0: i32) -> (i32, i32, i32) {
    %c0_i32 = arith.constant 0 : i32
    %c0_i32_0 = arith.constant 0 : i32
    %c0_i32_1 = arith.constant 0 : i32
    return %arg0, %c0_i32, %c0_i32_0 : i32, i32, i32
  }
  func.func @transform_1(%arg0: i32) -> (i32, i32) {
    %c0_i32 = arith.constant 0 : i32
    %c0_i32_0 = arith.constant 0 : i32
    %c0_i32_1 = arith.constant 0 : i32
    return %c0_i32, %c0_i32_0 : i32, i32
  }
  func.func @transform_2(%arg0: i32) -> (i32, i32) {
    %c0_i32 = arith.constant 0 : i32
    %c0_i32_0 = arith.constant 0 : i32
    %c0_i32_1 = arith.constant 0 : i32
    return %c0_i32, %c0_i32_0 : i32, i32
  }
  func.func @transform_3(%arg0: i32) -> (i32, i32, i32) {
    %c0_i32 = arith.constant 0 : i32
    %c0_i32_0 = arith.constant 0 : i32
    %c0_i32_1 = arith.constant 0 : i32
    return %arg0, %c0_i32, %c0_i32_0 : i32, i32, i32
  }
}

</mosaic_0001>

<llo_original>
// kernel: embedding_forward.1
$region0: #{embedding_forward.1}
  #allocation0 [shape = 'u32[]', space=smem, size = 0x4, offset = 0x4, fixed_abs, tag = 'smem constant byte address 0x4 - core index']
  #allocation1 [shape = 'u32[144,128]{1,0:T(1,128)}', space=vmem, size = 0x12000, scoped, tag = 'internal scratch']
  %s0 = inlined_call_operand.vmem [shape: bf16[2,24,128], index: 0, kind: input, shape index: {}]
  %s1 = inlined_call_operand.vmem [shape: bf16[128,128], index: 1, kind: input, shape index: {}]
  %s2 = inlined_call_operand.vmem [shape: f32[24,128], index: 2, kind: input, shape index: {}]
  %s3 = inlined_call_operand.vmem [shape: bf16[2,17,128], index: 3, kind: output, shape index: {}]
  %s4 = sld [smem:[#allocation0]]
  $region22: #{embedding_forward.1} parent=0
    _
  %s6 = ssub.s32 1, %s4
  %s7 = scalar_select 0, %s6, %s4
  // Predicated region
  $region2: #{embedding_forward.1} parent=0 // pred_check
    _
  $region3: #{embedding_forward.1} parent=0 // pred_check_branch
    %9 = sbr.rel (0) target = $region5
  $region4: #{embedding_forward.1} parent=0 // pred_region
    _
  $region5: #{embedding_forward.1} parent=0 // pred_fallthru
    _
  // Predicated region
  $region6: #{embedding_forward.1} parent=0 // pred_check
    _
  $region7: #{embedding_forward.1} parent=0 // pred_check_branch
    %11 = sbr.rel (0) target = $region9
  $region8: #{embedding_forward.1} parent=0 // pred_region
    _
  $region9: #{embedding_forward.1} parent=0 // pred_fallthru
    _
  // Predicated region
  $region10: #{embedding_forward.1} parent=0 // pred_check
    _
  $region11: #{embedding_forward.1} parent=0 // pred_check_branch
    %13 = sbr.rel (0) target = $region13
  $region12: #{embedding_forward.1} parent=0 // pred_region
    _
  $region13: #{embedding_forward.1} parent=0 // pred_fallthru
    _
  %v15 = vld [vmem:[%s0] sm:$0xf]
  %v16 = vld [vmem:[%s0 + $0x4] sm:$0xf]
  %v17 = vld [vmem:[%s0 + $0x8] sm:$0xf]
  %v18 = vld [vmem:[%s0 + $0xc] sm:$0xf]
  %v19 = vld [vmem:[%s0 + $0x10] sm:$0xf]
  %v20 = vld [vmem:[%s0 + $0x14] sm:$0xf]
  %v21 = vld [vmem:[%s1] sm:$0xf]
  %v22 = vld [vmem:[%s1 + $0x4] sm:$0xf]
  %v23 = vld [vmem:[%s1 + $0x8] sm:$0xf]
  %v24 = vld [vmem:[%s1 + $0xc] sm:$0xf]
  %v25 = vld [vmem:[%s1 + $0x10] sm:$0xf]
  %v26 = vld [vmem:[%s1 + $0x14] sm:$0xf]
  %v27 = vld [vmem:[%s1 + $0x18] sm:$0xf]
  %v28 = vld [vmem:[%s1 + $0x1c] sm:$0xf]
  %v29 = vld [vmem:[%s1 + $0x20] sm:$0xf]
  %v30 = vld [vmem:[%s1 + $0x24] sm:$0xf]
  %v31 = vld [vmem:[%s1 + $0x28] sm:$0xf]
  %v32 = vld [vmem:[%s1 + $0x2c] sm:$0xf]
  %v33 = vld [vmem:[%s1 + $0x30] sm:$0xf]
  %v34 = vld [vmem:[%s1 + $0x34] sm:$0xf]
  %v35 = vld [vmem:[%s1 + $0x38] sm:$0xf]
  %v36 = vld [vmem:[%s1 + $0x3c] sm:$0xf]
  %v43 = vunpack.c.l.b16 %v15
  %v44 = vunpack.c.l.b16 %v16
  %v45 = vunpack.c.l.b16 %v17
  %v46 = vunpack.c.l.b16 %v18
  %v47 = vunpack.c.l.b16 %v19
  %v48 = vunpack.c.l.b16 %v20
  %v49 = vpack.c.b16 %v44, %v43
  %v50 = vpack.c.b16 %v46, %v45
  %v51 = vpack.c.b16 %v48, %v47
  %v71 = vunpack.c.l.b16 %v21
  %v72 = vunpack.c.l.b16 %v22
  %v73 = vunpack.c.l.b16 %v23
  %v74 = vunpack.c.l.b16 %v24
  %v75 = vunpack.c.l.b16 %v25
  %v76 = vunpack.c.l.b16 %v26
  %v77 = vunpack.c.l.b16 %v27
  %v78 = vunpack.c.l.b16 %v28
  %v79 = vunpack.c.l.b16 %v29
  %v80 = vunpack.c.l.b16 %v30
  %v81 = vunpack.c.l.b16 %v31
  %v82 = vunpack.c.l.b16 %v32
  %v83 = vunpack.c.l.b16 %v33
  %v84 = vunpack.c.l.b16 %v34
  %v85 = vunpack.c.l.b16 %v35
  %v86 = vunpack.c.l.b16 %v36
  %v87 = vpack.c.b16 %v72, %v71
  %v88 = vpack.c.b16 %v74, %v73
  %v89 = vpack.c.b16 %v76, %v75
  %v90 = vpack.c.b16 %v78, %v77
  %v91 = vpack.c.b16 %v80, %v79
  %v92 = vpack.c.b16 %v82, %v81
  %v93 = vpack.c.b16 %v84, %v83
  %v94 = vpack.c.b16 %v86, %v85
  %103 = vmatprep.subr.bf16.mxu0 0
  %104 = vmatpush1.bf16.msra.mxu0 %v87
  %105 = vmatprep.subr.bf16.mxu0 0
  %106 = vmatpush1.bf16.msra.mxu0 %v88
  %107 = vmatprep.subr.bf16.mxu0 0
  %108 = vmatpush1.bf16.msra.mxu0 %v89
  %109 = vmatprep.subr.bf16.mxu0 0
  %110 = vmatpush1.bf16.msra.mxu0 %v90
  %111 = vmatprep.subr.bf16.mxu0 0
  %112 = vmatpush1.bf16.msra.mxu0 %v91
  %113 = vmatprep.subr.bf16.mxu0 0
  %114 = vmatpush1.bf16.msra.mxu0 %v92
  %115 = vmatprep.subr.bf16.mxu0 0
  %116 = vmatpush1.bf16.msra.mxu0 %v93
  %117 = vmatprep.subr.bf16.mxu0 0
  %118 = vmatpush1.bf16.msra.mxu0 %v94
  %119 = vmatprep.subr.bf16.mxu0 0
  %120 = vmatpush1.bf16.msra.mxu0 0
  %121 = vmatprep.subr.bf16.mxu0 0
  %122 = vmatpush1.bf16.msra.mxu0 0
  %123 = vmatprep.subr.bf16.mxu0 0
  %124 = vmatpush1.bf16.msra.mxu0 0
  %125 = vmatprep.subr.bf16.mxu0 0
  %126 = vmatpush1.bf16.msra.mxu0 0
  %127 = vmatprep.subr.bf16.mxu0 0
  %128 = vmatpush1.bf16.msra.mxu0 0
  %129 = vmatprep.subr.bf16.mxu0 0
  %130 = vmatpush1.bf16.msra.mxu0 0
  %131 = vmatprep.subr.bf16.mxu0 0
  %132 = vmatpush1.bf16.msra.mxu0 0
  %133 = vmatprep.subr.bf16.mxu0 0
  %134 = vmatpush1.bf16.msra.mxu0 0
  %135 = vmatprep.mubr.bf16.mxu0 0
  %136 = vmatmul.mubr.bf16.gmra.mrb[0].mxu0 %v49
  %v137 = vpop.f32.mrb[0].mxu0
  %v138 = vadd.f32 0.0, %v137
  %v139 = vpop.f32.mrb[0].mxu0
  %v140 = vpop.f32.mrb[0].mxu0
  %v141 = vadd.f32 0.0, %v140
  %v142 = vpop.f32.mrb[0].mxu0
  %143 = vmatprep.mubr.bf16.mxu0 0
  %144 = vmatmul.mubr.bf16.gmra.mrb[0].mxu0 %v50
  %v145 = vpop.f32.mrb[0].mxu0
  %v146 = vadd.f32 0.0, %v145
  %v147 = vpop.f32.mrb[0].mxu0
  %v148 = vpop.f32.mrb[0].mxu0
  %v149 = vadd.f32 0.0, %v148
  %v150 = vpop.f32.mrb[0].mxu0
  %151 = vmatprep.mubr.bf16.mxu0 0
  %152 = vmatmul.mubr.bf16.gmra.mrb[0].mxu0 %v51
  %v153 = vpop.f32.mrb[0].mxu0
  %v154 = vadd.f32 0.0, %v153
  %v155 = vpop.f32.mrb[0].mxu0
  %v156 = vpop.f32.mrb[0].mxu0
  %v157 = vadd.f32 0.0, %v156
  %v158 = vpop.f32.mrb[0].mxu0
  %159 = vdwg.mxu0
  %v160 = vld [vmem:[%s2] sm:$0xff]
  %v161 = vld [vmem:[%s2 + $0x8] sm:$0xff]
  %v162 = vld [vmem:[%s2 + $0x10] sm:$0xff]
  %v163 = vadd.f32 %v138, %v160
  %v164 = vadd.f32 %v141, %v161
  %v165 = vadd.f32 %v146, %v162
  %v166 = vadd.f32 %v149, %v160
  %v167 = vadd.f32 %v154, %v161
  %v168 = vadd.f32 %v157, %v162
  %v169 = vpack.c.bf16 %v164, %v163
  %v170 = vpack.c.bf16 %v167, %v166
  %v173 = vunpack.c.l.b16 %v169
  %v174 = vunpack.c.h.b16 %v169
  %v175 = vunpack.c.l.b16 %v170
  %v176 = vunpack.c.h.b16 %v170
  %v177 = vpack.c.b16 %v173, %v173
  %v178 = vpack.c.b16 %v174, %v174
  %v179 = vpack.c.b16 %v175, %v175
  %v180 = vpack.c.b16 %v176, %v176
  %185 = vst [vmem:[%s3] sm:$0xf] %v177
  %186 = vst [vmem:[%s3 + $0x4] sm:$0xf] %v178
  %187 = vst [vmem:[%s3 + $0xc] sm:$0xf] %v179
  %188 = vst [vmem:[%s3 + $0x10] sm:$0xf] %v180
  %v189 = vpack.c.bf16 %v165, %v165
  %v190 = vpack.c.bf16 %v168, %v168
  %vm191 = vcmask 1040384
  %vm192 = vsmask.f32 256
  %vm193 = vmand %vm191, %vm192
  %v194 = vld [vmem:[%s3 + $0x8] sm:$0x1]
  %v195 = vsel %vm193, %v189, %v194
  %196 = vst [vmem:[%s3 + $0x8] sm:$0x1] %v195
  %v197 = vld [vmem:[%s3 + $0x14] sm:$0x1]
  %v198 = vsel %vm193, %v190, %v197
  %199 = vst [vmem:[%s3 + $0x14] sm:$0x1] %v198
  // Predicated region
  $region14: #{embedding_forward.1} parent=0 // pred_check
    _
  $region15: #{embedding_forward.1} parent=0 // pred_check_branch
    %201 = sbr.rel (0) target = $region17
  $region16: #{embedding_forward.1} parent=0 // pred_region
    _
  $region17: #{embedding_forward.1} parent=0 // pred_fallthru
    _
  // Predicated region
  $region18: #{embedding_forward.1} parent=0 // pred_check
    _
  $region19: #{embedding_forward.1} parent=0 // pred_check_branch
    %203 = sbr.rel (0) target = $region21
  $region20: #{embedding_forward.1} parent=0 // pred_region
    _
  $region21: #{embedding_forward.1} parent=0 // pred_fallthru
    _

</llo_original>
